<compile_context>
chip_gen: v7x
topology: tpu7x:2x2x1
jax: 0.10.0
libtpu: 0.0.40
codegen_flags: <defaults>
</compile_context>

<pallas_src>
import functools

import jax
import jax.numpy as jnp
from jax.experimental import pallas as pl
from jax.experimental.pallas import tpu as pltpu


def _round_up(v, m):
    return ((v + m - 1) // m) * m


def _row_packing(*dtypes):
    """Sublane row packing of the narrowest input dtype (32b->8, 16b->16, 8b->32)."""
    min_item = min(jnp.dtype(d).itemsize for d in dtypes)
    return max(8, 32 // max(1, min_item))


def _vmem_budget_bytes():
    """Generation-aware (tile_budget, vmem_limit) in bytes."""
    phys = 64 * 1024 * 1024  # conservative fallback (v7x per-TC VMEM)
    try:
        info = pltpu.get_tpu_info()
        cap = getattr(info, "vmem_capacity_bytes", None)
        if cap:
            phys = int(cap)
    except Exception:
        pass
    # Leave headroom under the physical ceiling:
    #   v5e/v6e (128 MiB) -> 96 MiB limit, v7x (64 MiB/TC) -> 48 MiB limit.
    limit = min((phys * 3) // 4, 100 * 1024 * 1024)
    # Tile working-set budget (double-buffered inputs + f32 temporaries).
    budget = limit // 2
    return budget, limit


def _choose_tile_n(n, c, x_itemsize, t_itemsize, packing, vmem_budget_bytes,
                   stream_bytes_per_step=4 << 20, max_rows=None):
    """Row-tile size sized by HBM bytes-per-step and the VMEM working-set budget."""
    # HBM bytes streamed per row (both input matrices).
    stream_per_row = c * (x_itemsize + t_itemsize)
    # VMEM-resident bytes per row: 2x double-buffered input tiles plus ~4
    # full-width f32 temporaries inside the body (iota / exp / masks).
    resident_per_row = 2 * c * (x_itemsize + t_itemsize) + 4 * c * 4

    tile = min(stream_bytes_per_step // stream_per_row,
               vmem_budget_bytes // resident_per_row)
    if max_rows is not None:
        tile = min(tile, max_rows)
    tile = max(packing, (int(tile) // packing) * packing)   # round down to packing
    tile = min(tile, _round_up(n, packing))                 # never exceed padded N

    # Megacore (v7x): guarantee >= 2 grid tiles whenever N allows it so the
    # "parallel" grid axis can be split across both TensorCores.
    if n > packing and pl.cdiv(n, tile) < 2:
        tile = max(packing, _round_up((n + 1) // 2, packing))
    return tile


def _label_smoothing_ce_kernel(x_ref, t_ref, o_ref, *, smoothing, n_rows):
    confidence = 1.0 - smoothing

    # targets stay in their input dtype (no f32 upcast needed for an argmax).
    t = t_ref[...]                        # (TILE_N, C)
    # f32 for a stable logsumexp (no-op copy for f32 inputs).
    x = x_ref[...].astype(jnp.float32)    # (TILE_N, C)
    tn, c = x.shape

    col = jax.lax.broadcasted_iota(jnp.int32, (tn, c), 1)

    # --- targets first (their temporaries die before the x work is live) ---
    # target = argmax(targets, dim=1), first occurrence like torch.max.
    # NOTE: a NaN row in targets makes t == t_max false everywhere and the
    # row silently picks the sentinel index (x_at_tgt == 0); acceptable only
    # for garbage rows.
    t_max = jnp.max(t, axis=1, keepdims=True)
    candidate = jnp.where(t == t_max, col, c)                  # sentinel c elsewhere
    target_idx = jnp.min(candidate, axis=1, keepdims=True)     # (TILE_N, 1) int32

    # --- logits: stable logsumexp, gather at target via iota mask, row mean ---
    x_max = jnp.max(x, axis=1, keepdims=True)                              # (TILE_N, 1)
    sum_exp = jnp.sum(jnp.exp(x - x_max), axis=1, keepdims=True)           # (TILE_N, 1)
    lse = x_max + jnp.log(sum_exp)                                         # (TILE_N, 1)
    x_at_tgt = jnp.sum(jnp.where(col == target_idx, x, 0.0),
                       axis=1, keepdims=True)                              # (TILE_N, 1)
    x_mean = jnp.sum(x, axis=1, keepdims=True) * (1.0 / c)                 # (TILE_N, 1)

    loss = confidence * (lse - x_at_tgt) + smoothing * (lse - x_mean)      # (TILE_N, 1)

    # Ragged last row-tile: SELECT (not multiply) so Inf/NaN computed on the
    # undefined padded rows cannot propagate into the partial sum.
    row = pl.program_id(0) * tn + jax.lax.broadcasted_iota(jnp.int32, (tn, 1), 0)
    masked = jnp.where(row < n_rows, loss, 0.0)

    # Per-tile partial sum (cross-lane/sublane reduce on the XLU slot).
    partial = jnp.sum(masked)

    # One aligned, lane-dense (8, 128) output block per tile: partial at [0, 0],
    # zeros elsewhere -> a single unmasked vst, exact sum in the XLA epilogue.
    r8 = jax.lax.broadcasted_iota(jnp.int32, (8, 128), 0)
    c128 = jax.lax.broadcasted_iota(jnp.int32, (8, 128), 1)
    o_ref[...] = jnp.where((r8 == 0) & (c128 == 0), partial, 0.0)


def label_smoothing_cross_entropy(x, targets, smoothing=0.1, max_rows=None):
    assert 0.0 < smoothing < 1.0
    assert x.ndim == 2 and x.shape == targets.shape
    N, C = x.shape

    x_item = jnp.dtype(x.dtype).itemsize
    t_item = jnp.dtype(targets.dtype).itemsize
    packing = _row_packing(x.dtype, targets.dtype)
    vmem_budget, vmem_limit = _vmem_budget_bytes()

    tile_n = _choose_tile_n(N, C, x_item, t_item, packing, vmem_budget,
                            max_rows=max_rows)
    num_tiles = pl.cdiv(N, tile_n)

    kernel = functools.partial(
        _label_smoothing_ce_kernel, smoothing=float(smoothing), n_rows=N
    )

    partials = pl.pallas_call(
        kernel,
        grid=(num_tiles,),
        in_specs=[
            pl.BlockSpec((tile_n, C), lambda i: (i, 0)),
            pl.BlockSpec((tile_n, C), lambda i: (i, 0)),
        ],
        out_specs=pl.BlockSpec((8, 128), lambda i: (i, 0)),
        out_shape=jax.ShapeDtypeStruct((num_tiles * 8, 128), jnp.float32),
        compiler_params=pltpu.CompilerParams(
            dimension_semantics=("parallel",),
            vmem_limit_bytes=int(vmem_limit),
        ),
    )(x, targets)

    # Tiny final reduction in XLA: only [8*i, 0] entries are non-zero.
    return jnp.sum(partials) / N


def _reference(x, targets, smoothing=0.1):
    confidence = 1.0 - smoothing
    target = jnp.argmax(targets, axis=1)
    log_yhat = jax.nn.log_softmax(x, axis=1)
    cross = -log_yhat[jnp.arange(x.shape[0]), target]
    smooth = -log_yhat.mean(axis=1)
    return (confidence * cross + smoothing * smooth).mean()


if __name__ == "__main__":
    key = jax.random.PRNGKey(0)
    k1, k2, k3, k4, k5, k6 = jax.random.split(key, 6)

    # 1) small, exact-multiple shape with one-hot targets (single tile)
    N, C = 8, 32
    x = jax.random.normal(k1, (N, C), dtype=jnp.float32)
    labels = jax.random.randint(k2, (N,), 0, C)
    targets = jax.nn.one_hot(labels, C, dtype=jnp.float32)
    loss = label_smoothing_cross_entropy(x, targets, smoothing=0.1)
    jax.block_until_ready(loss)
    ref = _reference(x, targets, smoothing=0.1)
    assert jnp.allclose(loss, ref, atol=1e-5, rtol=1e-5), (loss, ref)

    # 2) ragged row count (not a multiple of 8), non-one-hot score targets,
    #    a deliberate argmax tie in row 0, and the >=2-tile megacore split.
    N2, C2 = 10, 32
    x2 = jax.random.normal(k3, (N2, C2), dtype=jnp.float32)
    t2 = jax.random.normal(k4, (N2, C2), dtype=jnp.float32)
    t2 = t2.at[0, 3].set(7.0).at[0, 9].set(7.0)   # tie -> first occurrence wins
    loss2 = label_smoothing_cross_entropy(x2, t2, smoothing=0.2)
    jax.block_until_ready(loss2)
    ref2 = _reference(x2, t2, smoothing=0.2)
    assert jnp.allclose(loss2, ref2, atol=1e-5, rtol=1e-5), (loss2, ref2)

    # 3) multi-tile grid with a ragged last row tile (forced small max_rows)
    N3, C3 = 300, 160
    x3 = jax.random.normal(k5, (N3, C3), dtype=jnp.float32)
    labels3 = jax.random.randint(k6, (N3,), 0, C3)
    t3 = jax.nn.one_hot(labels3, C3, dtype=jnp.float32)
    loss3 = label_smoothing_cross_entropy(x3, t3, smoothing=0.1, max_rows=64)
    jax.block_until_ready(loss3)
    ref3 = _reference(x3, t3, smoothing=0.1)
    assert jnp.allclose(loss3, ref3, atol=1e-5, rtol=1e-5), (loss3, ref3)

    print("KERNEL_OK")
</pallas_src>

<mosaic_0001>
module attributes {stable_mosaic.version = 11 : i64} {
  func.func @_label_smoothing_ce_kernel(%arg0: i32, %arg1: memref<8x32xf32, #tpu.memory_space<vmem>>, %arg2: memref<8x32xf32, #tpu.memory_space<vmem>>, %arg3: memref<8x128xf32, #tpu.memory_space<vmem>>) attributes {dimension_semantics = [#tpu.dimension_semantics<parallel>], iteration_bounds = array<i64: 1>, scalar_prefetch = 0 : i64, scratch_operands = 0 : i64, tpu.core_type = #tpu.core_type<tc>, window_params = [{transform_indices = @transform_0, window_bounds = array<i64: 8, 32>}, {transform_indices = @transform_1, window_bounds = array<i64: 8, 32>}, {transform_indices = @transform_2, window_bounds = array<i64: 8, 128>}]} {
    %c0 = arith.constant 0 : index
    %c0_0 = arith.constant 0 : index
    %0 = vector.load %arg2[%c0, %c0_0] : memref<8x32xf32, #tpu.memory_space<vmem>>, vector<8x32xf32>
    %c0_1 = arith.constant 0 : index
    %c0_2 = arith.constant 0 : index
    %1 = vector.load %arg1[%c0_1, %c0_2] : memref<8x32xf32, #tpu.memory_space<vmem>>, vector<8x32xf32>
    %2 = tpu.iota {dimensions = array<i32: 1>} : vector<8x32xi32>
    %cst = arith.constant dense<0xFF800000> : vector<8xf32>
    %3 = vector.multi_reduction <maximumf>, %0, %cst [1] : vector<8x32xf32> to vector<8xf32>
    %4 = vector.shape_cast %3 : vector<8xf32> to vector<8x1xf32>
    %5 = vector.broadcast %4 : vector<8x1xf32> to vector<8x32xf32>
    %6 = arith.cmpf oeq, %0, %5 : vector<8x32xf32>
    %c32_i32 = arith.constant 32 : i32
    %7 = vector.broadcast %c32_i32 : i32 to vector<8x32xi32>
    %8 = arith.select %6, %2, %7 : vector<8x32xi1>, vector<8x32xi32>
    %cst_3 = arith.constant dense<2147483647> : vector<8xi32>
    %9 = vector.multi_reduction <minsi>, %8, %cst_3 [1] : vector<8x32xi32> to vector<8xi32>
    %10 = vector.shape_cast %9 : vector<8xi32> to vector<8x1xi32>
    %cst_4 = arith.constant dense<0xFF800000> : vector<8xf32>
    %11 = vector.multi_reduction <maximumf>, %1, %cst_4 [1] : vector<8x32xf32> to vector<8xf32>
    %12 = vector.shape_cast %11 : vector<8xf32> to vector<8x1xf32>
    %13 = vector.broadcast %12 : vector<8x1xf32> to vector<8x32xf32>
    %14 = arith.subf %1, %13 : vector<8x32xf32>
    %15 = math.exp %14 : vector<8x32xf32>
    %cst_5 = arith.constant dense<0.000000e+00> : vector<8xf32>
    %16 = vector.multi_reduction <add>, %15, %cst_5 [1] : vector<8x32xf32> to vector<8xf32>
    %17 = vector.shape_cast %16 : vector<8xf32> to vector<8x1xf32>
    %18 = math.log %17 : vector<8x1xf32>
    %19 = arith.addf %12, %18 : vector<8x1xf32>
    %20 = vector.broadcast %10 : vector<8x1xi32> to vector<8x32xi32>
    %21 = arith.cmpi eq, %2, %20 : vector<8x32xi32>
    %cst_6 = arith.constant 0.000000e+00 : f32
    %22 = vector.broadcast %cst_6 : f32 to vector<8x32xf32>
    %23 = arith.select %21, %1, %22 : vector<8x32xi1>, vector<8x32xf32>
    %cst_7 = arith.constant dense<0.000000e+00> : vector<8xf32>
    %24 = vector.multi_reduction <add>, %23, %cst_7 [1] : vector<8x32xf32> to vector<8xf32>
    %25 = vector.shape_cast %24 : vector<8xf32> to vector<8x1xf32>
    %cst_8 = arith.constant dense<0.000000e+00> : vector<8xf32>
    %26 = vector.multi_reduction <add>, %1, %cst_8 [1] : vector<8x32xf32> to vector<8xf32>
    %27 = vector.shape_cast %26 : vector<8xf32> to vector<8x1xf32>
    %cst_9 = arith.constant 3.125000e-02 : f32
    %28 = vector.broadcast %cst_9 : f32 to vector<8x1xf32>
    %29 = arith.mulf %27, %28 : vector<8x1xf32>
    %30 = arith.subf %19, %25 : vector<8x1xf32>
    %cst_10 = arith.constant 0.899999976 : f32
    %31 = vector.broadcast %cst_10 : f32 to vector<8x1xf32>
    %32 = arith.mulf %31, %30 : vector<8x1xf32>
    %33 = arith.subf %19, %29 : vector<8x1xf32>
    %cst_11 = arith.constant 1.000000e-01 : f32
    %34 = vector.broadcast %cst_11 : f32 to vector<8x1xf32>
    %35 = arith.mulf %34, %33 : vector<8x1xf32>
    %36 = arith.addf %32, %35 : vector<8x1xf32>
    %c8_i32 = arith.constant 8 : i32
    %37 = arith.muli %arg0, %c8_i32 : i32
    %38 = tpu.iota {dimensions = array<i32: 0>} : vector<8x1xi32>
    %39 = vector.broadcast %37 : i32 to vector<8x1xi32>
    %40 = arith.addi %39, %38 : vector<8x1xi32>
    %c8_i32_12 = arith.constant 8 : i32
    %41 = vector.broadcast %c8_i32_12 : i32 to vector<8x1xi32>
    %42 = arith.cmpi slt, %40, %41 : vector<8x1xi32>
    %cst_13 = arith.constant 0.000000e+00 : f32
    %43 = vector.broadcast %cst_13 : f32 to vector<8x1xf32>
    %44 = arith.select %42, %36, %43 : vector<8x1xi1>, vector<8x1xf32>
    %45 = vector.shape_cast %44 : vector<8x1xf32> to vector<1x8x1xf32>
    %cst_14 = arith.constant dense<0.000000e+00> : vector<1xf32>
    %46 = vector.multi_reduction <add>, %45, %cst_14 [1, 2] : vector<1x8x1xf32> to vector<1xf32>
    %47 = vector.shape_cast %46 : vector<1xf32> to vector<1x1x1xf32>
    %48 = vector.extract %47[0, 0, 0] : f32 from vector<1x1x1xf32>
    %49 = tpu.iota {dimensions = array<i32: 0>} : vector<8x128xi32>
    %50 = tpu.iota {dimensions = array<i32: 1>} : vector<8x128xi32>
    %c0_i32 = arith.constant 0 : i32
    %51 = vector.broadcast %c0_i32 : i32 to vector<8x128xi32>
    %52 = arith.cmpi eq, %49, %51 : vector<8x128xi32>
    %c0_i32_15 = arith.constant 0 : i32
    %53 = vector.broadcast %c0_i32_15 : i32 to vector<8x128xi32>
    %54 = arith.cmpi eq, %50, %53 : vector<8x128xi32>
    %55 = arith.andi %52, %54 : vector<8x128xi1>
    %cst_16 = arith.constant 0.000000e+00 : f32
    %56 = vector.broadcast %48 : f32 to vector<8x128xf32>
    %57 = vector.broadcast %cst_16 : f32 to vector<8x128xf32>
    %58 = arith.select %55, %56, %57 : vector<8x128xi1>, vector<8x128xf32>
    %c0_17 = arith.constant 0 : index
    %c0_18 = arith.constant 0 : index
    %59 = vector.load %arg3[%c0_17, %c0_18] : memref<8x128xf32, #tpu.memory_space<vmem>>, vector<8x128xf32>
    tpu.vector_store %arg3[%c0_17, %c0_18], %58 {strides = array<i32>} : memref<8x128xf32, #tpu.memory_space<vmem>>, vector<8x128xf32>,
    return
  }
  func.func @transform_0(%arg0: i32) -> (i32, i32) {
    %c0_i32 = arith.constant 0 : i32
    %c0_i32_0 = arith.constant 0 : i32
    return %arg0, %c0_i32 : i32, i32
  }
  func.func @transform_1(%arg0: i32) -> (i32, i32) {
    %c0_i32 = arith.constant 0 : i32
    %c0_i32_0 = arith.constant 0 : i32
    return %arg0, %c0_i32 : i32, i32
  }
  func.func @transform_2(%arg0: i32) -> (i32, i32) {
    %c0_i32 = arith.constant 0 : i32
    %c0_i32_0 = arith.constant 0 : i32
    return %arg0, %c0_i32 : i32, i32
  }
}

</mosaic_0001>

<llo_original>
// kernel: tpu_custom_call.1
$region0: #{tpu_custom_call.1}
  #allocation0 [shape = 'u32[]', space=smem, size = 0x4, offset = 0x4, fixed_abs, tag = 'smem constant byte address 0x4 - core index']
  #allocation1 [shape = 'u32[144,128]{1,0:T(1,128)}', space=vmem, size = 0x12000, scoped, tag = 'internal scratch']
  %s0 = inlined_call_operand.hbm [shape: f32[8,32], index: 0, kind: input, shape index: {}]
  %s1 = inlined_call_operand.hbm [shape: f32[8,32], index: 1, kind: input, shape index: {}]
  %s2 = inlined_call_operand.hbm [shape: f32[8,128], index: 2, kind: output, shape index: {}]
  %s3 = sld [smem:[#allocation0]]
  $region26: #{tpu_custom_call.1} parent=0
    _
  %s5 = ssub.s32 1, %s3
  %s6 = scalar_select 0, %s5, %s3
  $region1: #{tpu_custom_call.1} parent=0
    #allocation2 [shape = 'u8[4096]{0}', space=vmem, size = 0x1000, scoped, tag = 'input window, operand 0, single buffered']
    #allocation3 [shape = 's32[1]{0}', space=sflag, size = 0x4, scoped, tag = 'scoped memory for tpu_custom_call.1']
    #allocation4 [shape = 's32[1]{0}', space=sflag, size = 0x4, scoped, tag = 'scoped memory for tpu_custom_call.1']
    #allocation5 [shape = 'u8[4096]{0}', space=vmem, size = 0x1000, scoped, tag = 'input window, operand 1, single buffered']
    #allocation6 [shape = 's32[1]{0}', space=sflag, size = 0x4, scoped, tag = 'scoped memory for tpu_custom_call.1']
    #allocation7 [shape = 'u8[4096]{0}', space=vmem, size = 0x1000, scoped, tag = 'output window, operand 0, single buffered']
    %7 = vsyncpa [#allocation3], 0
    %8 = vsyncpa [#allocation6], 0
    %9 = vsyncpa [#allocation4], 0
    // Predicated region
    $region2: #{tpu_custom_call.1} parent=1 // pred_check
      _
    $region3: #{tpu_custom_call.1} parent=1 // pred_check_branch
      %11 = sbr.rel (0) target = $region5
    $region4: #{tpu_custom_call.1} parent=1 // pred_region
      %s13 = ssub.s32 128, 128
      %14 = vsyncadd [#allocation3], %s13
      %s16 = sshll.u32 [#allocation2], 4
      %s17 = int_to_ptr.vmem [resolvable:$true] %s16
      %19 = dma.hbm_to_vmem [thread:$0]  %s0, 128, %s17, [#allocation3]
    $region5: #{tpu_custom_call.1} parent=1 // pred_fallthru
      _
    // Predicated region
    $region6: #{tpu_custom_call.1} parent=1 // pred_check
      _
    $region7: #{tpu_custom_call.1} parent=1 // pred_check_branch
      %21 = sbr.rel (0) target = $region9
    $region8: #{tpu_custom_call.1} parent=1 // pred_region
      %s23 = ssub.s32 128, 128
      %24 = vsyncadd [#allocation6], %s23
      %s26 = sshll.u32 [#allocation5], 4
      %s27 = int_to_ptr.vmem [resolvable:$true] %s26
      %29 = dma.hbm_to_vmem [thread:$0]  %s1, 128, %s27, [#allocation6]
    $region9: #{tpu_custom_call.1} parent=1 // pred_fallthru
      _
    // Predicated region
    $region10: #{tpu_custom_call.1} parent=1 // pred_check
      _
    $region11: #{tpu_custom_call.1} parent=1 // pred_check_branch
      %31 = sbr.rel (0) target = $region13
    $region12: #{tpu_custom_call.1} parent=1 // pred_region
      %32 = dma.done [#allocation3], 128
    $region13: #{tpu_custom_call.1} parent=1 // pred_fallthru
      _
    // Predicated region
    $region14: #{tpu_custom_call.1} parent=1 // pred_check
      _
    $region15: #{tpu_custom_call.1} parent=1 // pred_check_branch
      %34 = sbr.rel (0) target = $region17
    $region16: #{tpu_custom_call.1} parent=1 // pred_region
      %35 = dma.done [#allocation6], 128
    $region17: #{tpu_custom_call.1} parent=1 // pred_fallthru
      _
    %v36 = vld [vmem:[#allocation5] sm:$0xff]
    %v37 = vld [vmem:[#allocation2] sm:$0xff]
    %v38 = vlaneseq
    %v39 = vand.u32 %v38, 127
    %vm40 = vcmask 261120
    %v41 = vsel %vm40, %v36, -inf
    %42 = vmax.xlane.f32.xlu0 %v41
    %v43 = vpop.xlane.xlu0 %42
    %vm44 = vcmp.eq.f32.partialorder %v36, %v43
    %v45 = vsel %vm44, %v39, 32
    %v46 = vsel %vm40, %v45, 2147483647
    %v47 = vand.u32 %v46, 65535
    %v48 = vshra.s32 %v46, 16
    %v49 = vcvt.s32.f32 %v47
    %v50 = vcvt.s32.f32 %v48
    %51 = vmin.xlane.f32.xlu0 %v50
    %v52 = vpop.xlane.xlu0 %51
    %vm53 = vcmp.eq.f32.partialorder %v50, %v52
    %v54 = vsel %vm53, %v49, inf
    %55 = vmin.xlane.f32.xlu0 %v54
    %v56 = vpop.xlane.xlu0 %55
    %v57 = vcvt.f32.s32 %v56
    %v58 = vcvt.f32.s32 %v52
    %v59 = vshll.u32 %v58, 16
    %v60 = vadd.s32 %v59, %v57
    %v61 = vsel %vm40, %v37, -inf
    %62 = vmax.xlane.f32.xlu0 %v61
    %v63 = vpop.xlane.xlu0 %62
    %v64 = vsub.f32 %v37, %v63
    %v65 = vmul.f32 %v64, 1.442695
    %v66 = vpow.pop %v65
    %v67 = vsel %vm40, %v66, 0.0
    %68 = vadd.xlane.f32.xlu0 %v67
    %v69 = vpop.xlane.xlu0 %68
    %v70 = vlog2.pop %v69
    %v71 = vmul.f32 %v70, 0.6931472
    %v72 = vadd.f32 %v63, %v71
    %vm73 = vcmp.eq.s32.totalorder %v39, %v60
    %v74 = vsel %vm73, %v37, 0.0
    %v75 = vsel %vm40, %v74, 0.0
    %76 = vadd.xlane.f32.xlu0 %v75
    %v77 = vpop.xlane.xlu0 %76
    %v78 = vsel %vm40, %v37, 0.0
    %79 = vadd.xlane.f32.xlu0 %v78
    %v80 = vpop.xlane.xlu0 %79
    %v81 = vmul.f32 %v80, 0.03125
    %v82 = vsub.f32 %v72, %v77
    %v83 = vmul.f32 %v82, 0.9
    %v84 = vsub.f32 %v72, %v81
    %v85 = vmul.f32 %v84, 0.1
    %v86 = vadd.f32 %v83, %v85
    %s87 = smul.u32 0, 8
    %v88 = vlaneseq
    %v89 = vshrl.u32 %v88, 7
    %v90 = vstv %s87
    %v91 = vadd.s32 %v90, %v89
    %vm92 = vcmp.lt.s32.totalorder %v91, 8
    %v93 = vsel %vm92, %v86, 0.0
    %vm94 = vcmask 7168
    %v95 = vsel %vm94, %v93, 0.0
    %96 = vadd.xlane.f32.xlu0 %v95
    %v97 = vpop.xlane.xlu0 %96
    %v98 = vrot.slane %v97, 4
    %v99 = vadd.f32 %v97, %v98
    %v100 = vrot.slane %v99, 2
    %v101 = vadd.f32 %v99, %v100
    %v102 = vrot.slane %v101, 1
    %v103 = vadd.f32 %v101, %v102
    %s104 = vtos %v103
    %vm105 = vcmp.eq.s32.totalorder %v89, 0
    %vm106 = vcmp.eq.s32.totalorder %v39, 0
    %vm107 = vmand %vm105, %vm106
    %v108 = vstv %s104
    %v109 = vsel %vm107, %v108, 0.0
    %110 = vst [vmem:[#allocation7] sm:$0xff] %v109
    // Predicated region
    $region18: #{tpu_custom_call.1} parent=1 // pred_check
      _
    $region19: #{tpu_custom_call.1} parent=1 // pred_check_branch
      %112 = sbr.rel (0) target = $region21
    $region20: #{tpu_custom_call.1} parent=1 // pred_region
      %s114 = ssub.s32 128, 128
      %115 = vsyncadd [#allocation4], %s114
      %s117 = sshll.u32 [#allocation7], 4
      %s118 = int_to_ptr.vmem [resolvable:$true] %s117
      %120 = dma.vmem_to_hbm [thread:$0]  %s118, 128, %s2, [#allocation4]
    $region21: #{tpu_custom_call.1} parent=1 // pred_fallthru
      _
    // Predicated region
    $region22: #{tpu_custom_call.1} parent=1 // pred_check
      _
    $region23: #{tpu_custom_call.1} parent=1 // pred_check_branch
      %122 = sbr.rel (0) target = $region25
    $region24: #{tpu_custom_call.1} parent=1 // pred_region
      %123 = dma.done [#allocation4], 128
    $region25: #{tpu_custom_call.1} parent=1 // pred_fallthru
      _
    %124 = vsyncpa [#allocation3], 1
    %125 = vsyncpa [#allocation6], 1
    %126 = vsyncpa [#allocation4], 1

</llo_original>
